<compile_context>
chip_gen: v6e
topology: v6e:2x2x1
jax: 0.10.0
libtpu: 0.0.40
codegen_flags: <defaults>
</compile_context>

<pallas_src>
import jax
import jax.numpy as jnp
from jax import lax
from jax.experimental import pallas as pl
from jax.experimental.pallas import tpu as pltpu


def _nn_kernel(x_ref, w1_ref, p_ref, c_ref, out_ref):
    # ---- Linear 1 on the MXU :  (N, D) @ (D, H) + b1 ----
    h = jnp.dot(x_ref[...], w1_ref[...], preferred_element_type=jnp.float32)
    b1 = p_ref[0:1, :]        # (1, H)
    gw2 = p_ref[1:2, :]       # (1, H)  == gamma * w2

    # ---- ReLU ----
    h = jnp.maximum(h + b1, 0.0)

    # ---- Batch stats in one pass over h: mean and E[h^2] ----
    inv_n = 1.0 / h.shape[0]
    mean = jnp.sum(h, axis=0, keepdims=True) * inv_n           # (1, H)
    mean_sq = jnp.sum(h * h, axis=0, keepdims=True) * inv_n    # (1, H)
    var = jnp.maximum(mean_sq - mean * mean, 0.0)              # biased var, clamped
    inv_std = lax.rsqrt(var + 1e-5)                            # (1, H)

    # ---- BN + Linear2 fused:  out = h @ (inv_std*gw2) + c ----
    #   c = c_const - sum(mean * inv_std * gw2),   c_const = b2 + sum(beta*w2)
    w_eff = inv_std * gw2                                      # (1, H)
    c = c_ref[0, 0] - jnp.sum(mean * w_eff)                    # scalar

    # ---- Linear 2 as VPU multiply + lane reduction (skip the MXU) ----
    # TODO(synk): output is (N, 1) -> masked vst; make lane-dense in a
    #   large-N variant.
    out_ref[...] = jnp.sum(h * w_eff, axis=-1, keepdims=True) + c


def nn_forward(x, w1, packed, c_const):
    """x: (N, D) f32.  packed: (2, H) = [b1 ; gamma*w2].  c_const: (1, 1).
    Returns (N, 1) f32."""
    N, D = x.shape
    H = w1.shape[1]
    assert w1.shape == (D, H) and packed.shape == (2, H) and c_const.shape == (1, 1)

    return pl.pallas_call(
        _nn_kernel,
        out_shape=jax.ShapeDtypeStruct((N, 1), jnp.float32),
        # Shapes are tiny: whole arrays live in VMEM (scalar in SMEM), no grid.
        in_specs=[
            pl.BlockSpec(memory_space=pltpu.VMEM),   # x
            pl.BlockSpec(memory_space=pltpu.VMEM),   # w1
            pl.BlockSpec(memory_space=pltpu.VMEM),   # packed [b1 ; gamma*w2]
            pl.BlockSpec(memory_space=pltpu.SMEM),   # c_const (1,1) scalar
        ],
        out_specs=pl.BlockSpec(memory_space=pltpu.VMEM),
    )(x, w1, packed, c_const)


def init_params(key, D, hidden):
    """Deterministic init mimicking nn.Linear defaults (uniform +-1/sqrt(fan_in)).
    BatchNorm1d: gamma=1, beta=0 (PyTorch default).  w2 stored as a (1, H) row."""
    k1, k2, k3, k4 = jax.random.split(key, 4)
    bound1 = 1.0 / jnp.sqrt(D)
    w1 = jax.random.uniform(k1, (D, hidden), jnp.float32, -bound1, bound1)
    b1 = jax.random.uniform(k2, (1, hidden), jnp.float32, -bound1, bound1)
    bound2 = 1.0 / jnp.sqrt(hidden)
    w2_row = jax.random.uniform(k3, (1, hidden), jnp.float32, -bound2, bound2)
    b2 = jax.random.uniform(k4, (1, 1), jnp.float32, -bound2, bound2)
    gamma = jnp.ones((1, hidden), jnp.float32)
    beta = jnp.zeros((1, hidden), jnp.float32)
    return w1, b1, gamma, beta, w2_row, b2


def fold_params(b1, gamma, beta, w2_row, b2):
    """One-time (init-time) folding of the batch-independent BN/Linear2 algebra.
    Returns the packed (2, H) VMEM slab and the (1, 1) SMEM constant."""
    gw2 = gamma * w2_row                                              # (1, H)
    c_const = b2 + jnp.sum(beta * w2_row, axis=-1, keepdims=True)     # (1, 1)
    packed = jnp.concatenate([b1, gw2], axis=0)                       # (2, H)
    return packed, c_const


def nn_reference(x, w1, b1, gamma, beta, w2_row, b2):
    """Pure-JAX reference of the PyTorch forward (training-mode BN, unfused)."""
    h = jnp.maximum(x @ w1 + b1, 0.0)
    mean = jnp.mean(h, axis=0, keepdims=True)
    var = jnp.mean((h - mean) ** 2, axis=0, keepdims=True)
    h = (h - mean) * lax.rsqrt(var + 1e-5) * gamma + beta
    return h @ w2_row.T + b2


if __name__ == "__main__":
    # Small shapes consistent with the module: x is (batch, D).
    N, D, hidden = 8, 16, 32
    key = jax.random.PRNGKey(0)
    kx, kp = jax.random.split(key)

    x = jax.random.normal(kx, (N, D), dtype=jnp.float32)
    w1, b1, gamma, beta, w2_row, b2 = init_params(kp, D, hidden)
    packed, c_const = fold_params(b1, gamma, beta, w2_row, b2)

    out = nn_forward(x, w1, packed, c_const)
    out = jax.block_until_ready(out)

    ref = nn_reference(x, w1, b1, gamma, beta, w2_row, b2)
    assert out.shape == (N, 1)
    assert jnp.allclose(out, ref, atol=1e-4, rtol=1e-4), (out, ref)

    print("KERNEL_OK")
</pallas_src>

<mosaic_0001>
module attributes {stable_mosaic.version = 11 : i64} {
  func.func @_nn_kernel(%arg0: memref<8x16xf32, #tpu.memory_space<vmem>>, %arg1: memref<16x32xf32, #tpu.memory_space<vmem>>, %arg2: memref<2x32xf32, #tpu.memory_space<vmem>>, %arg3: memref<1x1xf32, #tpu.memory_space<smem>>, %arg4: memref<8x1xf32, #tpu.memory_space<vmem>>) attributes {dimension_semantics = [], scalar_prefetch = 0 : i64, scratch_operands = 0 : i64, tpu.core_type = #tpu.core_type<tc>} {
    %c0 = arith.constant 0 : index
    %c0_0 = arith.constant 0 : index
    %0 = vector.load %arg0[%c0, %c0_0] : memref<8x16xf32, #tpu.memory_space<vmem>>, vector<8x16xf32>
    %c0_1 = arith.constant 0 : index
    %c0_2 = arith.constant 0 : index
    %1 = vector.load %arg1[%c0_1, %c0_2] : memref<16x32xf32, #tpu.memory_space<vmem>>, vector<16x32xf32>
    %cst = arith.constant dense<0.000000e+00> : vector<8x32xf32>
    %2 = tpu.matmul %0, %1, %cst {dimension_numbers = #tpu.dot_dimension_numbers<[1], [0], [0], [1], [0, 0, 1, 1], [], []>} : vector<8x16xf32>, vector<16x32xf32>, vector<8x32xf32> -> vector<8x32xf32>
    %c0_3 = arith.constant 0 : index
    %c0_4 = arith.constant 0 : index
    %3 = vector.load %arg2[%c0_3, %c0_4] : memref<2x32xf32, #tpu.memory_space<vmem>>, vector<1x32xf32>
    %c1 = arith.constant 1 : index
    %c0_5 = arith.constant 0 : index
    %4 = vector.load %arg2[%c1, %c0_5] : memref<2x32xf32, #tpu.memory_space<vmem>>, vector<1x32xf32>
    %5 = vector.broadcast %3 : vector<1x32xf32> to vector<8x32xf32>
    %6 = arith.addf %2, %5 : vector<8x32xf32>
    %cst_6 = arith.constant 0.000000e+00 : f32
    %7 = vector.broadcast %cst_6 : f32 to vector<8x32xf32>
    %8 = arith.maximumf %6, %7 : vector<8x32xf32>
    %cst_7 = arith.constant dense<0.000000e+00> : vector<32xf32>
    %9 = vector.multi_reduction <add>, %8, %cst_7 [0] : vector<8x32xf32> to vector<32xf32>
    %10 = vector.shape_cast %9 : vector<32xf32> to vector<1x32xf32>
    %cst_8 = arith.constant 1.250000e-01 : f32
    %11 = vector.broadcast %cst_8 : f32 to vector<1x32xf32>
    %12 = arith.mulf %10, %11 : vector<1x32xf32>
    %13 = arith.mulf %8, %8 : vector<8x32xf32>
    %cst_9 = arith.constant dense<0.000000e+00> : vector<32xf32>
    %14 = vector.multi_reduction <add>, %13, %cst_9 [0] : vector<8x32xf32> to vector<32xf32>
    %15 = vector.shape_cast %14 : vector<32xf32> to vector<1x32xf32>
    %cst_10 = arith.constant 1.250000e-01 : f32
    %16 = vector.broadcast %cst_10 : f32 to vector<1x32xf32>
    %17 = arith.mulf %15, %16 : vector<1x32xf32>
    %18 = arith.mulf %12, %12 : vector<1x32xf32>
    %19 = arith.subf %17, %18 : vector<1x32xf32>
    %cst_11 = arith.constant 0.000000e+00 : f32
    %20 = vector.broadcast %cst_11 : f32 to vector<1x32xf32>
    %21 = arith.maximumf %19, %20 : vector<1x32xf32>
    %cst_12 = arith.constant 9.99999974E-6 : f32
    %22 = vector.broadcast %cst_12 : f32 to vector<1x32xf32>
    %23 = arith.addf %21, %22 : vector<1x32xf32>
    %24 = math.rsqrt %23 : vector<1x32xf32>
    %25 = arith.mulf %24, %4 : vector<1x32xf32>
    %c0_13 = arith.constant 0 : index
    %c0_14 = arith.constant 0 : index
    %26 = memref.load %arg3[%c0_13, %c0_14] : memref<1x1xf32, #tpu.memory_space<smem>>
    %27 = arith.mulf %12, %25 : vector<1x32xf32>
    %28 = vector.shape_cast %27 : vector<1x32xf32> to vector<1x1x32xf32>
    %cst_15 = arith.constant dense<0.000000e+00> : vector<1xf32>
    %29 = vector.multi_reduction <add>, %28, %cst_15 [1, 2] : vector<1x1x32xf32> to vector<1xf32>
    %30 = vector.shape_cast %29 : vector<1xf32> to vector<1x1x1xf32>
    %31 = vector.extract %30[0, 0, 0] : f32 from vector<1x1x1xf32>
    %32 = arith.subf %26, %31 : f32
    %33 = vector.broadcast %25 : vector<1x32xf32> to vector<8x32xf32>
    %34 = arith.mulf %8, %33 : vector<8x32xf32>
    %cst_16 = arith.constant dense<0.000000e+00> : vector<8xf32>
    %35 = vector.multi_reduction <add>, %34, %cst_16 [1] : vector<8x32xf32> to vector<8xf32>
    %36 = vector.shape_cast %35 : vector<8xf32> to vector<8x1xf32>
    %37 = vector.broadcast %32 : f32 to vector<8x1xf32>
    %38 = arith.addf %36, %37 : vector<8x1xf32>
    %c0_17 = arith.constant 0 : index
    %c0_18 = arith.constant 0 : index
    %39 = vector.load %arg4[%c0_17, %c0_18] : memref<8x1xf32, #tpu.memory_space<vmem>>, vector<8x1xf32>
    tpu.vector_store %arg4[%c0_17, %c0_18], %38 {strides = array<i32>} : memref<8x1xf32, #tpu.memory_space<vmem>>, vector<8x1xf32>,
    return
  }
}

</mosaic_0001>

<llo_original>
// kernel: tpu_custom_call.1
$region0: #{tpu_custom_call.1}
  #allocation0 [shape = 'u32[]', space=smem, size = 0x4, offset = 0x4, fixed_abs, tag = 'smem constant byte address 0x4 - core index']
  #allocation1 [shape = 'u32[144,128]{1,0:T(1,128)}', space=vmem, size = 0x12000, scoped, tag = 'internal scratch']
  #allocation2 [shape = 'f32[1,1]{1,0:T(1,128)S(6)}', space=smem, size = 0x200, scoped, tag = 'scoped memory for tpu_custom_call.1']
  %s0 = inlined_call_operand.hbm [shape: f32[8,16], index: 0, kind: input, shape index: {}]
  %s1 = inlined_call_operand.hbm [shape: f32[16,32], index: 1, kind: input, shape index: {}]
  %s2 = inlined_call_operand.vmem [shape: f32[2,32], index: 2, kind: input, shape index: {}]
  %s3 = inlined_call_operand.<no memory space> [shape: f32[1,1], index: 3, kind: input, shape index: {}]
  %s4 = inlined_call_operand.vmem [shape: f32[8,1], index: 4, kind: output, shape index: {}]
  %s5 = sld [smem:[#allocation0]]
  $region34: #{tpu_custom_call.1} parent=0
    _
  %s7 = ssub.s32 1, %s5
  %s8 = scalar_select 0, %s7, %s5
  %9 = sst [smem:[#allocation2]] %s3
  $region1: #{tpu_custom_call.1} parent=0
    #allocation3 [shape = 'u8[4096]{0}', space=vmem, size = 0x1000, scoped, tag = 'input window, operand 0, single buffered']
    #allocation4 [shape = 's32[1]{0}', space=sflag, size = 0x4, scoped, tag = 'scoped memory for tpu_custom_call.1']
    #allocation5 [shape = 'u8[8192]{0}', space=vmem, size = 0x2000, scoped, tag = 'input window, operand 1, single buffered']
    #allocation6 [shape = 's32[1]{0}', space=sflag, size = 0x4, scoped, tag = 'scoped memory for tpu_custom_call.1']
    %10 = vsyncpa [#allocation4], 0
    %11 = vsyncpa [#allocation6], 0
    // Predicated region
    $region2: #{tpu_custom_call.1} parent=1 // pred_check
      _
    $region3: #{tpu_custom_call.1} parent=1 // pred_check_branch
      %13 = sbr.rel (0) target = $region5
    $region4: #{tpu_custom_call.1} parent=1 // pred_region
      %s15 = ssub.s32 128, 128
      %16 = vsyncadd [#allocation4], %s15
      %s18 = sshll.u32 [#allocation3], 4
      %s19 = int_to_ptr.vmem [resolvable:$true] %s18
      %21 = dma.hbm_to_vmem [thread:$0]  %s0, 128, %s19, [#allocation4]
    $region5: #{tpu_custom_call.1} parent=1 // pred_fallthru
      _
    // Predicated region
    $region6: #{tpu_custom_call.1} parent=1 // pred_check
      _
    $region7: #{tpu_custom_call.1} parent=1 // pred_check_branch
      %23 = sbr.rel (0) target = $region9
    $region8: #{tpu_custom_call.1} parent=1 // pred_region
      %s25 = ssub.s32 256, 256
      %26 = vsyncadd [#allocation6], %s25
      %s27 = sshll.u32 [#allocation5], 4
      %s28 = int_to_ptr.vmem [resolvable:$true] %s27
      %33 = dma.hbm_to_vmem [thread:$0]  %s1, 256, %s28, [#allocation6], 128, 128, 8
    $region9: #{tpu_custom_call.1} parent=1 // pred_fallthru
      _
    // Predicated region
    $region10: #{tpu_custom_call.1} parent=1 // pred_check
      _
    $region11: #{tpu_custom_call.1} parent=1 // pred_check_branch
      %35 = sbr.rel (0) target = $region13
    $region12: #{tpu_custom_call.1} parent=1 // pred_region
      _
    $region13: #{tpu_custom_call.1} parent=1 // pred_fallthru
      _
    // Predicated region
    $region14: #{tpu_custom_call.1} parent=1 // pred_check
      _
    $region15: #{tpu_custom_call.1} parent=1 // pred_check_branch
      %37 = sbr.rel (0) target = $region17
    $region16: #{tpu_custom_call.1} parent=1 // pred_region
      _
    $region17: #{tpu_custom_call.1} parent=1 // pred_fallthru
      _
    // Predicated region
    $region18: #{tpu_custom_call.1} parent=1 // pred_check
      _
    $region19: #{tpu_custom_call.1} parent=1 // pred_check_branch
      %39 = sbr.rel (0) target = $region21
    $region20: #{tpu_custom_call.1} parent=1 // pred_region
      %40 = dma.done [#allocation4], 128
    $region21: #{tpu_custom_call.1} parent=1 // pred_fallthru
      _
    // Predicated region
    $region22: #{tpu_custom_call.1} parent=1 // pred_check
      _
    $region23: #{tpu_custom_call.1} parent=1 // pred_check_branch
      %42 = sbr.rel (0) target = $region25
    $region24: #{tpu_custom_call.1} parent=1 // pred_region
      %43 = dma.done [#allocation6], 256
    $region25: #{tpu_custom_call.1} parent=1 // pred_fallthru
      _
    %v44 = vld [vmem:[#allocation3] sm:$0xff]
    %v45 = vld [vmem:[#allocation5] sm:$0xff]
    %v46 = vld [vmem:[#allocation5 + $0x8] sm:$0xff]
    %v47 = vld [vmem:[%s2] sm:$0x1]
    %v48 = vld [vmem:[%s2 + $0x1] sm:$0x1]
    %v49 = vlaneseq
    %v50 = vshrl.u32 %v49, 7
    %v51 = vsub.s32 0, %v50
    %v52 = vrot.slane %v47, %v51
    %vm53 = vcmask 130048
    %v55 = vsel %vm53, %v44, 0
    %57 = vmatprep.subr.mxu0 0.0
    %58 = vmatpush1.msra.mxu0 0.0
    %59 = vmatprep.subr.mxu0 0.0
    %60 = vmatpush1.msra.mxu0 0.0
    %61 = vmatprep.subr.mxu0 0.0
    %62 = vmatpush1.msra.mxu0 0.0
    %63 = vmatprep.subr.mxu0 0.0
    %64 = vmatpush1.msra.mxu0 0.0
    %65 = vmatprep.subr.mxu0 0.0
    %66 = vmatpush1.msra.mxu0 0.0
    %67 = vmatprep.subr.mxu0 0.0
    %68 = vmatpush1.msra.mxu0 0.0
    %69 = vmatprep.subr.mxu0 0.0
    %70 = vmatpush1.msra.mxu0 0.0
    %71 = vmatprep.subr.mxu0 0.0
    %72 = vmatpush1.msra.mxu0 0.0
    %73 = vmatprep.subr.mxu0 0.0
    %74 = vmatpush1.msra.mxu0 0.0
    %75 = vmatprep.subr.mxu0 0.0
    %76 = vmatpush1.msra.mxu0 0.0
    %77 = vmatprep.subr.mxu0 0.0
    %78 = vmatpush1.msra.mxu0 0.0
    %79 = vmatprep.subr.mxu0 0.0
    %80 = vmatpush1.msra.mxu0 0.0
    %81 = vmatprep.subr.mxu0 0.0
    %82 = vmatpush1.msra.mxu0 0.0
    %83 = vmatprep.subr.mxu0 0.0
    %84 = vmatpush1.msra.mxu0 0.0
    %85 = vmatprep.subr.mxu0 0.0
    %86 = vmatpush1.msra.mxu0 %v46
    %87 = vmatprep.subr.mxu0 0.0
    %88 = vmatpush1.msra.mxu0 %v45
    %89 = vmatprep.subr.mxu0 0.0
    %90 = vmatpush2.msra.mxu0 0.0
    %91 = vmatprep.subr.mxu0 0.0
    %92 = vmatpush2.msra.mxu0 0.0
    %93 = vmatprep.subr.mxu0 0.0
    %94 = vmatpush2.msra.mxu0 0.0
    %95 = vmatprep.subr.mxu0 0.0
    %96 = vmatpush2.msra.mxu0 0.0
    %97 = vmatprep.subr.mxu0 0.0
    %98 = vmatpush2.msra.mxu0 0.0
    %99 = vmatprep.subr.mxu0 0.0
    %100 = vmatpush2.msra.mxu0 0.0
    %101 = vmatprep.subr.mxu0 0.0
    %102 = vmatpush2.msra.mxu0 0.0
    %103 = vmatprep.subr.mxu0 0.0
    %104 = vmatpush2.msra.mxu0 0.0
    %105 = vmatprep.subr.mxu0 0.0
    %106 = vmatpush2.msra.mxu0 0.0
    %107 = vmatprep.subr.mxu0 0.0
    %108 = vmatpush2.msra.mxu0 0.0
    %109 = vmatprep.subr.mxu0 0.0
    %110 = vmatpush2.msra.mxu0 0.0
    %111 = vmatprep.subr.mxu0 0.0
    %112 = vmatpush2.msra.mxu0 0.0
    %113 = vmatprep.subr.mxu0 0.0
    %114 = vmatpush2.msra.mxu0 0.0
    %115 = vmatprep.subr.mxu0 0.0
    %116 = vmatpush2.msra.mxu0 0.0
    %117 = vmatprep.subr.mxu0 0.0
    %118 = vmatpush2.msra.mxu0 0.0
    %119 = vmatprep.subr.mxu0 0.0
    %120 = vmatpush2.msra.mxu0 0.0
    %121 = vmatprep.mubr.f32.mxu0 0.0
    %122 = vmatmul.mubr.f32.gmra.mxu0 %v55
    %v123 = vpop.f32.mrf.mxu0
    %v124 = vadd.f32 %v52, %v123
    %v125 = vpop.f32.mrf.mxu0
    %126 = vdwg.mxu0
    %v127 = vmax.f32 %v124, 0.0
    %vm128 = vcmask 261120
    %v129 = vsel %vm128, %v127, 0.0
    %v130 = vrot.slane %v129, 4
    %v131 = vadd.f32 %v129, %v130
    %v132 = vrot.slane %v131, 2
    %v133 = vadd.f32 %v131, %v132
    %v134 = vrot.slane %v133, 1
    %v135 = vadd.f32 %v133, %v134
    %v136 = vmul.f32 %v135, 0.125
    %v137 = vmul.f32 %v127, %v127
    %v138 = vsel %vm128, %v137, 0.0
    %v139 = vrot.slane %v138, 4
    %v140 = vadd.f32 %v138, %v139
    %v141 = vrot.slane %v140, 2
    %v142 = vadd.f32 %v140, %v141
    %v143 = vrot.slane %v142, 1
    %v144 = vadd.f32 %v142, %v143
    %v145 = vmul.f32 %v144, 0.125
    %v146 = vmul.f32 %v136, %v136
    %v147 = vsub.f32 %v145, %v146
    %v148 = vmax.f32 %v147, 0.0
    %v149 = vadd.f32 %v148, 1e-05
    %v150 = vrsqrt.pop %v149
    %v151 = vmul.f32 %v150, %v48
    %s152 = sld [smem:[#allocation2]]
    %v153 = vmul.f32 %v136, %v151
    %vm154 = vcmask 253952
    %v155 = vsel %vm154, %v153, 0.0
    %156 = vadd.xlane.f32.xlu0 %v155
    %v157 = vpop.xlane.xlu0 %156
    %v158 = vrot.slane %v157, 4
    %v159 = vadd.f32 %v157, %v158
    %v160 = vrot.slane %v159, 2
    %v161 = vadd.f32 %v159, %v160
    %v162 = vrot.slane %v161, 1
    %v163 = vadd.f32 %v161, %v162
    %s164 = vtos %v163
    %s165 = ssub.f32 %s152, %s164
    %v166 = vlaneseq
    %v167 = vshrl.u32 %v166, 7
    %v168 = vsub.s32 0, %v167
    %v169 = vrot.slane %v151, %v168
    %v170 = vmul.f32 %v127, %v169
    %v171 = vsel %vm128, %v170, 0.0
    %172 = vadd.xlane.f32.xlu0 %v171
    %v173 = vpop.xlane.xlu0 %172
    %v174 = vstv %s165
    %v175 = vadd.f32 %v173, %v174
    %vm176 = vcmask 7168
    %177 = vst.msk [vmem:[%s4] sm:$0xff] %vm176, %v175
    // Predicated region
    $region26: #{tpu_custom_call.1} parent=1 // pred_check
      _
    $region27: #{tpu_custom_call.1} parent=1 // pred_check_branch
      %179 = sbr.rel (0) target = $region29
    $region28: #{tpu_custom_call.1} parent=1 // pred_region
      _
    $region29: #{tpu_custom_call.1} parent=1 // pred_fallthru
      _
    // Predicated region
    $region30: #{tpu_custom_call.1} parent=1 // pred_check
      _
    $region31: #{tpu_custom_call.1} parent=1 // pred_check_branch
      %181 = sbr.rel (0) target = $region33
    $region32: #{tpu_custom_call.1} parent=1 // pred_region
      _
    $region33: #{tpu_custom_call.1} parent=1 // pred_fallthru
      _
    %182 = vsyncpa [#allocation4], 1
    %183 = vsyncpa [#allocation6], 1

</llo_original>
